<compile_context>
chip_gen: v7x
topology: tpu7x:2x2x1
jax: 0.10.0
libtpu: 0.0.40
codegen_flags: <defaults>
</compile_context>

<pallas_src>
import functools

import jax
import jax.numpy as jnp
from jax.experimental import pallas as pl
from jax.experimental.pallas import tpu as pltpu


def _round_up(x, m):
    return ((x + m - 1) // m) * m


def _aggregator_kernel(self_ref, extra_ref, nvf_ref, nw_ref,
                       w1bd_ref, w1b_ref, w2bd_ref, w3_ref, out_ref, *, K, D):
    mxu_dtype = w1bd_ref.dtype          # bf16 (perf path) or f32 (exact path)

    ev = extra_ref[...]                  # (tm, D)
    nvf = nvf_ref[...]                   # (tm, K*D)  lane-dense neighbor slab
    nw = nw_ref[...]                     # (tm, K)
    w1b = w1b_ref[...]                   # (1, D)     f32

    # --- stage 1: alpha_k = leaky_relu(cat([ev*nv_k, nw_k]) @ w1) for all K ---
    # ev replicated per head via lane concat (block layout matches nvf), then a
    # single lane-dense MXU matmul against blockdiag(w1[:D]).
    ev_k = jnp.concatenate([ev] * K, axis=-1)                       # (tm, K*D)
    prod = (ev_k * nvf).astype(mxu_dtype)
    alpha = jnp.dot(prod, w1bd_ref[...], preferred_element_type=jnp.float32)
    # nw contribution is rank-1 per head: VPU broadcast instead of a
    # near-empty (contraction=K) MXU pass.
    nw_term = jnp.concatenate(
        [nw[:, k:k + 1].astype(jnp.float32) * w1b for k in range(K)], axis=-1)
    alpha = alpha + nw_term                                         # f32
    alpha = jnp.where(alpha >= 0, alpha, 0.2 * alpha)               # leaky_relu

    # --- stage 2: per-head score + softmax over K (f32) ---
    score = jnp.dot(alpha.astype(mxu_dtype), w2bd_ref[...],
                    preferred_element_type=jnp.float32)             # (tm, K)
    score = score - jnp.max(score, axis=-1, keepdims=True)
    p = jnp.exp(score)                                              # unnormalized
    inv_l = pl.reciprocal(jnp.sum(p, axis=-1, keepdims=True), approx=True)

    # --- stage 3: attention-weighted neighbor aggregation (VPU/XLU, no MXU) ---
    nvf_f32 = nvf.astype(jnp.float32)
    agg = p[:, 0:1] * nvf_f32[:, 0:D]
    for k in range(1, K):
        agg = agg + p[:, k:k + 1] * nvf_f32[:, k * D:(k + 1) * D]
    agg = agg * inv_l                                               # normalize

    # --- stage 4: cat([self, agg]) @ w_3, relu ---
    # TODO(synk): dropout is identity here (eval mode); training-mode dropout
    # would need pltpu.prng_random_bits.
    sv = self_ref[...]                                              # (tm, D)
    cat = jnp.concatenate([sv.astype(jnp.float32), agg], axis=-1)   # (tm, 2D)
    out = jnp.dot(cat.astype(mxu_dtype), w3_ref[...],
                  preferred_element_type=jnp.float32)
    out_ref[...] = jnp.maximum(out, 0.0).astype(out_ref.dtype)


def prepare_weights(params, K, mxu_dtype=jnp.bfloat16):
    """Build the kron/block-diagonal weight constants ONCE (hoisted out of the
    per-call path). `mxu_dtype` is the dtype fed to the MXU (bf16 recommended;
    accumulation stays f32 in the kernel)."""
    w1, w2, w3 = params['w_1'], params['w_2'], params['w_3']
    D = w2.shape[0]
    w1a = w1[:D, :]                                   # (D, D)
    w1b = w1[D:D + 1, :]                              # (1, D)
    eye_k = jnp.eye(K, dtype=jnp.float32)
    # TODO(synk): blockdiag kron wastes K x FLOPs/VMEM at large K*D; switch to a
    # per-head layout (head axis on sublanes / grid) for production shapes.
    return {
        'w1_bd': jnp.kron(eye_k, w1a.astype(jnp.float32)).astype(mxu_dtype),  # (K*D, K*D)
        'w1b': w1b.astype(jnp.float32),                                       # (1, D)
        'w2_bd': jnp.kron(eye_k, w2.astype(jnp.float32)).astype(mxu_dtype),   # (K*D, K)
        'w3': w3.astype(mxu_dtype),                                           # (2D, D)
    }


def global_aggregator(self_vectors, neighbor_vector, neighbor_weight,
                      extra_vector, params=None, *, prepared=None,
                      tm=2048, mxu_dtype=jnp.bfloat16):
    if extra_vector is None:
        # TODO(synk): the extra_vector=None branch (plain mean over neighbors)
        # is not implemented in the Pallas path.
        raise NotImplementedError("extra_vector=None branch not implemented")

    B, N, K, D = neighbor_vector.shape
    M = B * N
    if prepared is None:
        prepared = prepare_weights(params, K=K, mxu_dtype=mxu_dtype)

    # Free (contiguous) reshapes — no HBM copies, no padding.
    sv = self_vectors.reshape(M, D)
    ev = extra_vector.reshape(M, D)
    nvf = neighbor_vector.reshape(M, K * D)
    nw = neighbor_weight.reshape(M, K)

    # Row tile: multiple of 8; cap so the parallel grid has >= 2 steps when
    # possible (keeps both v7x TensorCores busy), ragged tail handled by Pallas.
    tm_cap = _round_up(max(1, (M + 1) // 2), 8)
    tm = max(8, min(_round_up(tm, 8), tm_cap))
    grid = (pl.cdiv(M, tm),)

    kernel = functools.partial(_aggregator_kernel, K=K, D=D)

    out = pl.pallas_call(
        kernel,
        out_shape=jax.ShapeDtypeStruct((M, D), self_vectors.dtype),
        grid_spec=pltpu.PrefetchScalarGridSpec(
            num_scalar_prefetch=0,
            grid=grid,
            in_specs=[
                pl.BlockSpec((tm, D), lambda i: (i, 0)),          # self
                pl.BlockSpec((tm, D), lambda i: (i, 0)),          # extra
                pl.BlockSpec((tm, K * D), lambda i: (i, 0)),      # neighbors
                pl.BlockSpec((tm, K), lambda i: (i, 0)),          # neighbor wts
                pl.BlockSpec((K * D, K * D), lambda i: (0, 0)),   # blockdiag w1[:D]
                pl.BlockSpec((1, D), lambda i: (0, 0)),           # w1[D] row (f32)
                pl.BlockSpec((K * D, K), lambda i: (0, 0)),       # blockdiag w2
                pl.BlockSpec((2 * D, D), lambda i: (0, 0)),       # w3
            ],
            out_specs=pl.BlockSpec((tm, D), lambda i: (i, 0)),
        ),
        compiler_params=pltpu.CompilerParams(
            dimension_semantics=("parallel",),
            vmem_limit_bytes=32 * 1024 * 1024),
    )(sv, ev, nvf, nw, prepared['w1_bd'], prepared['w1b'],
      prepared['w2_bd'], prepared['w3'])

    # matches `output.view(batch_size, -1, self.dim)`
    return out.reshape(B, N, D)


def reference(self_vectors, neighbor_vector, neighbor_weight, extra_vector,
              params):
    """Plain-JAX transcription of the PyTorch forward (eval mode)."""
    w1, w2, w3 = params['w_1'], params['w_2'], params['w_3']
    B, N, K, D = neighbor_vector.shape
    prod = extra_vector[:, :, None, :] * neighbor_vector
    cat1 = jnp.concatenate([prod, neighbor_weight[..., None]], axis=-1)
    alpha = jnp.matmul(cat1, w1)
    alpha = jnp.where(alpha >= 0, alpha, 0.2 * alpha)          # leaky_relu 0.2
    alpha = jnp.matmul(alpha, w2)[..., 0]
    alpha = jax.nn.softmax(alpha, axis=-1)[..., None]
    nbr = jnp.sum(alpha * neighbor_vector, axis=-2)
    out = jnp.concatenate([self_vectors, nbr], axis=-1)
    out = jnp.matmul(out, w3)
    out = out.reshape(B, -1, D)
    return jnp.maximum(out, 0.0)


if __name__ == "__main__":
    B, N, K, D = 2, 8, 4, 32      # batch, nodes/session, neighbors, hidden dim
    key = jax.random.PRNGKey(0)
    ks = jax.random.split(key, 7)

    scale = 0.1
    params = {
        'w_1': scale * jax.random.normal(ks[0], (D + 1, D), jnp.float32),
        'w_2': scale * jax.random.normal(ks[1], (D, 1), jnp.float32),
        'w_3': scale * jax.random.normal(ks[2], (2 * D, D), jnp.float32),
        'bias': jnp.zeros((D,), jnp.float32),   # defined in __init__, unused in forward
    }

    self_vectors = jax.random.normal(ks[3], (B, N, D), jnp.float32)
    neighbor_vector = jax.random.normal(ks[4], (B, N, K, D), jnp.float32)
    neighbor_weight = jax.random.normal(ks[5], (B, N, K), jnp.float32)
    extra_vector = jax.random.normal(ks[6], (B, N, D), jnp.float32)

    ref = reference(self_vectors, neighbor_vector, neighbor_weight,
                    extra_vector, params)

    # Perf path: bf16 MXU operands, f32 accumulation / softmax.
    prepared_bf16 = prepare_weights(params, K=K, mxu_dtype=jnp.bfloat16)
    out = global_aggregator(self_vectors, neighbor_vector, neighbor_weight,
                            extra_vector, prepared=prepared_bf16)
    out = jax.block_until_ready(out)
    assert out.shape == (B, N, D)
    assert jnp.allclose(out, ref, atol=5e-2, rtol=5e-2), \
        "bf16 kernel mismatch vs reference"

    # Exactness check of the kernel structure with f32 MXU operands.
    prepared_f32 = prepare_weights(params, K=K, mxu_dtype=jnp.float32)
    out_f32 = global_aggregator(self_vectors, neighbor_vector, neighbor_weight,
                                extra_vector, prepared=prepared_f32)
    out_f32 = jax.block_until_ready(out_f32)
    assert jnp.allclose(out_f32, ref, atol=1e-2, rtol=1e-2), \
        "f32 kernel mismatch vs reference"

    print("KERNEL_OK")
</pallas_src>

<mosaic_0001>
module attributes {stable_mosaic.version = 11 : i64} {
  func.func @_aggregator_kernel(%arg0: i32, %arg1: memref<8x32xf32, #tpu.memory_space<vmem>>, %arg2: memref<8x32xf32, #tpu.memory_space<vmem>>, %arg3: memref<8x128xf32, #tpu.memory_space<vmem>>, %arg4: memref<8x4xf32, #tpu.memory_space<vmem>>, %arg5: memref<128x128xbf16, #tpu.memory_space<vmem>>, %arg6: memref<1x32xf32, #tpu.memory_space<vmem>>, %arg7: memref<128x4xbf16, #tpu.memory_space<vmem>>, %arg8: memref<64x32xbf16, #tpu.memory_space<vmem>>, %arg9: memref<8x32xf32, #tpu.memory_space<vmem>>) attributes {dimension_semantics = [#tpu.dimension_semantics<parallel>], iteration_bounds = array<i64: 2>, scalar_prefetch = 0 : i64, scratch_operands = 0 : i64, tpu.core_type = #tpu.core_type<tc>, window_params = [{transform_indices = @transform_0, window_bounds = array<i64: 8, 32>}, {transform_indices = @transform_1, window_bounds = array<i64: 8, 32>}, {transform_indices = @transform_2, window_bounds = array<i64: 8, 128>}, {transform_indices = @transform_3, window_bounds = array<i64: 8, 4>}, {pipeline_mode = #tpu.pipeline_mode<synchronous>, transform_indices = @transform_4, window_bounds = array<i64: 128, 128>}, {pipeline_mode = #tpu.pipeline_mode<synchronous>, transform_indices = @transform_5, window_bounds = array<i64: 1, 32>}, {pipeline_mode = #tpu.pipeline_mode<synchronous>, transform_indices = @transform_6, window_bounds = array<i64: 128, 4>}, {pipeline_mode = #tpu.pipeline_mode<synchronous>, transform_indices = @transform_7, window_bounds = array<i64: 64, 32>}, {transform_indices = @transform_8, window_bounds = array<i64: 8, 32>}]} {
    %c0 = arith.constant 0 : index
    %c0_0 = arith.constant 0 : index
    %0 = vector.load %arg2[%c0, %c0_0] : memref<8x32xf32, #tpu.memory_space<vmem>>, vector<8x32xf32>
    %c0_1 = arith.constant 0 : index
    %c0_2 = arith.constant 0 : index
    %1 = vector.load %arg3[%c0_1, %c0_2] : memref<8x128xf32, #tpu.memory_space<vmem>>, vector<8x128xf32>
    %c0_3 = arith.constant 0 : index
    %c0_4 = arith.constant 0 : index
    %2 = vector.load %arg4[%c0_3, %c0_4] : memref<8x4xf32, #tpu.memory_space<vmem>>, vector<8x4xf32>
    %c0_5 = arith.constant 0 : index
    %c0_6 = arith.constant 0 : index
    %3 = vector.load %arg6[%c0_5, %c0_6] : memref<1x32xf32, #tpu.memory_space<vmem>>, vector<1x32xf32>
    %4 = tpu.concatenate %0, %0, %0, %0 in 1 : vector<8x32xf32>, vector<8x32xf32>, vector<8x32xf32>, vector<8x32xf32> -> vector<8x128xf32>
    %5 = arith.mulf %4, %1 : vector<8x128xf32>
    %6 = arith.truncf %5 : vector<8x128xf32> to vector<8x128xbf16>
    %c0_7 = arith.constant 0 : index
    %c0_8 = arith.constant 0 : index
    %7 = vector.load %arg5[%c0_7, %c0_8] : memref<128x128xbf16, #tpu.memory_space<vmem>>, vector<128x128xbf16>
    %cst = arith.constant dense<0.000000e+00> : vector<8x128xf32>
    %8 = tpu.matmul %6, %7, %cst {dimension_numbers = #tpu.dot_dimension_numbers<[1], [0], [0], [1], [0, 0, 1, 1], [], []>} : vector<8x128xbf16>, vector<128x128xbf16>, vector<8x128xf32> -> vector<8x128xf32>
    %9 = vector.extract_strided_slice %2 {offsets = [0, 0], sizes = [8, 1], strides = [1, 1]} : vector<8x4xf32> to vector<8x1xf32>
    %10 = vector.broadcast %9 : vector<8x1xf32> to vector<8x32xf32>
    %11 = vector.broadcast %3 : vector<1x32xf32> to vector<8x32xf32>
    %12 = arith.mulf %10, %11 : vector<8x32xf32>
    %13 = vector.extract_strided_slice %2 {offsets = [0, 1], sizes = [8, 1], strides = [1, 1]} : vector<8x4xf32> to vector<8x1xf32>
    %14 = vector.broadcast %13 : vector<8x1xf32> to vector<8x32xf32>
    %15 = vector.broadcast %3 : vector<1x32xf32> to vector<8x32xf32>
    %16 = arith.mulf %14, %15 : vector<8x32xf32>
    %17 = vector.extract_strided_slice %2 {offsets = [0, 2], sizes = [8, 1], strides = [1, 1]} : vector<8x4xf32> to vector<8x1xf32>
    %18 = vector.broadcast %17 : vector<8x1xf32> to vector<8x32xf32>
    %19 = vector.broadcast %3 : vector<1x32xf32> to vector<8x32xf32>
    %20 = arith.mulf %18, %19 : vector<8x32xf32>
    %21 = vector.extract_strided_slice %2 {offsets = [0, 3], sizes = [8, 1], strides = [1, 1]} : vector<8x4xf32> to vector<8x1xf32>
    %22 = vector.broadcast %21 : vector<8x1xf32> to vector<8x32xf32>
    %23 = vector.broadcast %3 : vector<1x32xf32> to vector<8x32xf32>
    %24 = arith.mulf %22, %23 : vector<8x32xf32>
    %25 = tpu.concatenate %12, %16, %20, %24 in 1 : vector<8x32xf32>, vector<8x32xf32>, vector<8x32xf32>, vector<8x32xf32> -> vector<8x128xf32>
    %26 = arith.addf %8, %25 : vector<8x128xf32>
    %cst_9 = arith.constant 0.000000e+00 : f32
    %27 = vector.broadcast %cst_9 : f32 to vector<8x128xf32>
    %28 = arith.cmpf oge, %26, %27 : vector<8x128xf32>
    %cst_10 = arith.constant 2.000000e-01 : f32
    %29 = vector.broadcast %cst_10 : f32 to vector<8x128xf32>
    %30 = arith.mulf %29, %26 : vector<8x128xf32>
    %31 = arith.select %28, %26, %30 : vector<8x128xi1>, vector<8x128xf32>
    %32 = arith.truncf %31 : vector<8x128xf32> to vector<8x128xbf16>
    %c0_11 = arith.constant 0 : index
    %c0_12 = arith.constant 0 : index
    %33 = vector.load %arg7[%c0_11, %c0_12] : memref<128x4xbf16, #tpu.memory_space<vmem>>, vector<128x4xbf16>
    %cst_13 = arith.constant dense<0.000000e+00> : vector<8x4xf32>
    %34 = tpu.matmul %32, %33, %cst_13 {dimension_numbers = #tpu.dot_dimension_numbers<[1], [0], [0], [1], [0, 0, 1, 1], [], []>} : vector<8x128xbf16>, vector<128x4xbf16>, vector<8x4xf32> -> vector<8x4xf32>
    %cst_14 = arith.constant dense<0xFF800000> : vector<8xf32>
    %35 = vector.multi_reduction <maximumf>, %34, %cst_14 [1] : vector<8x4xf32> to vector<8xf32>
    %36 = vector.shape_cast %35 : vector<8xf32> to vector<8x1xf32>
    %37 = vector.broadcast %36 : vector<8x1xf32> to vector<8x4xf32>
    %38 = arith.subf %34, %37 : vector<8x4xf32>
    %39 = math.exp %38 : vector<8x4xf32>
    %cst_15 = arith.constant dense<0.000000e+00> : vector<8xf32>
    %40 = vector.multi_reduction <add>, %39, %cst_15 [1] : vector<8x4xf32> to vector<8xf32>
    %41 = vector.shape_cast %40 : vector<8xf32> to vector<8x1xf32>
    %42 = tpu.reciprocal %41 {approx = true} : vector<8x1xf32> -> vector<8x1xf32>
    %43 = vector.extract_strided_slice %39 {offsets = [0, 0], sizes = [8, 1], strides = [1, 1]} : vector<8x4xf32> to vector<8x1xf32>
    %44 = vector.extract_strided_slice %1 {offsets = [0, 0], sizes = [8, 32], strides = [1, 1]} : vector<8x128xf32> to vector<8x32xf32>
    %45 = vector.broadcast %43 : vector<8x1xf32> to vector<8x32xf32>
    %46 = arith.mulf %45, %44 : vector<8x32xf32>
    %47 = vector.extract_strided_slice %39 {offsets = [0, 1], sizes = [8, 1], strides = [1, 1]} : vector<8x4xf32> to vector<8x1xf32>
    %48 = vector.extract_strided_slice %1 {offsets = [0, 32], sizes = [8, 32], strides = [1, 1]} : vector<8x128xf32> to vector<8x32xf32>
    %49 = vector.broadcast %47 : vector<8x1xf32> to vector<8x32xf32>
    %50 = arith.mulf %49, %48 : vector<8x32xf32>
    %51 = arith.addf %46, %50 : vector<8x32xf32>
    %52 = vector.extract_strided_slice %39 {offsets = [0, 2], sizes = [8, 1], strides = [1, 1]} : vector<8x4xf32> to vector<8x1xf32>
    %53 = vector.extract_strided_slice %1 {offsets = [0, 64], sizes = [8, 32], strides = [1, 1]} : vector<8x128xf32> to vector<8x32xf32>
    %54 = vector.broadcast %52 : vector<8x1xf32> to vector<8x32xf32>
    %55 = arith.mulf %54, %53 : vector<8x32xf32>
    %56 = arith.addf %51, %55 : vector<8x32xf32>
    %57 = vector.extract_strided_slice %39 {offsets = [0, 3], sizes = [8, 1], strides = [1, 1]} : vector<8x4xf32> to vector<8x1xf32>
    %58 = vector.extract_strided_slice %1 {offsets = [0, 96], sizes = [8, 32], strides = [1, 1]} : vector<8x128xf32> to vector<8x32xf32>
    %59 = vector.broadcast %57 : vector<8x1xf32> to vector<8x32xf32>
    %60 = arith.mulf %59, %58 : vector<8x32xf32>
    %61 = arith.addf %56, %60 : vector<8x32xf32>
    %62 = vector.broadcast %42 : vector<8x1xf32> to vector<8x32xf32>
    %63 = arith.mulf %61, %62 : vector<8x32xf32>
    %c0_16 = arith.constant 0 : index
    %c0_17 = arith.constant 0 : index
    %64 = vector.load %arg1[%c0_16, %c0_17] : memref<8x32xf32, #tpu.memory_space<vmem>>, vector<8x32xf32>
    %65 = tpu.concatenate %64, %63 in 1 : vector<8x32xf32>, vector<8x32xf32> -> vector<8x64xf32>
    %66 = arith.truncf %65 : vector<8x64xf32> to vector<8x64xbf16>
    %c0_18 = arith.constant 0 : index
    %c0_19 = arith.constant 0 : index
    %67 = vector.load %arg8[%c0_18, %c0_19] : memref<64x32xbf16, #tpu.memory_space<vmem>>, vector<64x32xbf16>
    %cst_20 = arith.constant dense<0.000000e+00> : vector<8x32xf32>
    %68 = tpu.matmul %66, %67, %cst_20 {dimension_numbers = #tpu.dot_dimension_numbers<[1], [0], [0], [1], [0, 0, 1, 1], [], []>} : vector<8x64xbf16>, vector<64x32xbf16>, vector<8x32xf32> -> vector<8x32xf32>
    %cst_21 = arith.constant 0.000000e+00 : f32
    %69 = vector.broadcast %cst_21 : f32 to vector<8x32xf32>
    %70 = arith.maximumf %68, %69 : vector<8x32xf32>
    %c0_22 = arith.constant 0 : index
    %c0_23 = arith.constant 0 : index
    %71 = vector.load %arg9[%c0_22, %c0_23] : memref<8x32xf32, #tpu.memory_space<vmem>>, vector<8x32xf32>
    tpu.vector_store %arg9[%c0_22, %c0_23], %70 {strides = array<i32>} : memref<8x32xf32, #tpu.memory_space<vmem>>, vector<8x32xf32>,
    return
  }
  func.func @transform_0(%arg0: i32) -> (i32, i32) {
    %c0_i32 = arith.constant 0 : i32
    %c0_i32_0 = arith.constant 0 : i32
    return %arg0, %c0_i32 : i32, i32
  }
  func.func @transform_1(%arg0: i32) -> (i32, i32) {
    %c0_i32 = arith.constant 0 : i32
    %c0_i32_0 = arith.constant 0 : i32
    return %arg0, %c0_i32 : i32, i32
  }
  func.func @transform_2(%arg0: i32) -> (i32, i32) {
    %c0_i32 = arith.constant 0 : i32
    %c0_i32_0 = arith.constant 0 : i32
    return %arg0, %c0_i32 : i32, i32
  }
  func.func @transform_3(%arg0: i32) -> (i32, i32) {
    %c0_i32 = arith.constant 0 : i32
    %c0_i32_0 = arith.constant 0 : i32
    return %arg0, %c0_i32 : i32, i32
  }
  func.func @transform_4(%arg0: i32) -> (i32, i32) {
    %c0_i32 = arith.constant 0 : i32
    %c0_i32_0 = arith.constant 0 : i32
    %c0_i32_1 = arith.constant 0 : i32
    return %c0_i32, %c0_i32_0 : i32, i32
  }
  func.func @transform_5(%arg0: i32) -> (i32, i32) {
    %c0_i32 = arith.constant 0 : i32
    %c0_i32_0 = arith.constant 0 : i32
    %c0_i32_1 = arith.constant 0 : i32
    return %c0_i32, %c0_i32_0 : i32, i32
  }
  func.func @transform_6(%arg0: i32) -> (i32, i32) {
    %c0_i32 = arith.constant 0 : i32
    %c0_i32_0 = arith.constant 0 : i32
    %c0_i32_1 = arith.constant 0 : i32
    return %c0_i32, %c0_i32_0 : i32, i32
  }
  func.func @transform_7(%arg0: i32) -> (i32, i32) {
    %c0_i32 = arith.constant 0 : i32
    %c0_i32_0 = arith.constant 0 : i32
    %c0_i32_1 = arith.constant 0 : i32
    return %c0_i32, %c0_i32_0 : i32, i32
  }
  func.func @transform_8(%arg0: i32) -> (i32, i32) {
    %c0_i32 = arith.constant 0 : i32
    %c0_i32_0 = arith.constant 0 : i32
    return %arg0, %c0_i32 : i32, i32
  }
}

</mosaic_0001>

<llo_original>
// kernel: tpu_custom_call.1
$region0: #{tpu_custom_call.1}
  #allocation0 [shape = 'u32[]', space=smem, size = 0x4, offset = 0x4, fixed_abs, tag = 'smem constant byte address 0x4 - core index']
  #allocation1 [shape = 'u32[144,128]{1,0:T(1,128)}', space=vmem, size = 0x12000, scoped, tag = 'internal scratch']
  %s0 = inlined_call_operand.vmem [shape: f32[16,32], index: 0, kind: input, shape index: {}]
  %s1 = inlined_call_operand.vmem [shape: f32[16,32], index: 1, kind: input, shape index: {}]
  %s2 = inlined_call_operand.vmem [shape: f32[16,128], index: 2, kind: input, shape index: {}]
  %s3 = inlined_call_operand.vmem [shape: f32[16,4], index: 3, kind: input, shape index: {}]
  %s4 = inlined_call_operand.vmem [shape: bf16[128,128], index: 4, kind: input, shape index: {}]
  %s5 = inlined_call_operand.vmem [shape: f32[1,32], index: 5, kind: input, shape index: {}]
  %s6 = inlined_call_operand.vmem [shape: bf16[128,4], index: 6, kind: input, shape index: {}]
  %s7 = inlined_call_operand.vmem [shape: bf16[64,32], index: 7, kind: input, shape index: {}]
  %s8 = inlined_call_operand.hbm [shape: f32[16,32], index: 8, kind: output, shape index: {}]
  %s9 = sld [smem:[#allocation0]]
  $region65: #{tpu_custom_call.1} parent=0
    _
  %s11 = ssub.s32 1, %s9
  %s12 = scalar_select 0, %s11, %s9
  $region1: #{tpu_custom_call.1} parent=0
    #allocation2 [shape = 'u8[8192]{0}', space=vmem, size = 0x2000, scoped, tag = 'output window, operand 0']
    #allocation3 [shape = 's32[2]{0}', space=sflag, size = 0x8, scoped, tag = 'scoped memory for tpu_custom_call.1']
    %13 = vsyncpa [#allocation3], 0
    %s14 = scalar_lea.sflag [#allocation3], 1
    %15 = vsyncpa %s14, 0
    loop: start=0, step=1, limit=4
    $region2: #{tpu_custom_call.1} parent=1 // loop_pre_header
      _
    $region3: #{tpu_custom_call.1} parent=1 // loop_header
      %s17 = sphi 0, %s21
      %p18 = scmp.ge.s32.totalorder %s17, 4
      %s27 = sphi 0, %s29
      %s30 = sphi 0, %s27
      %s31 = sphi 0, %s30
      %s47 = sphi 0, %s31
      %s53 = sphi 0, %s55
      %s56 = sphi 0, %s53
      %s57 = sphi 0, %s56
      %s73 = sphi 0, %s57
      %s79 = sphi 0, %s81
      %s82 = sphi 0, %s79
      %s83 = sphi 0, %s82
      %s99 = sphi 0, %s83
      %s105 = sphi 0, %s107
      %s108 = sphi 0, %s105
      %s109 = sphi 0, %s108
      %s125 = sphi 0, %s109
      %s129 = sphi 0, %s129
      %s131 = sphi 0, %s129
      %s132 = sphi 0, %s131
      %s146 = sphi 0, %s132
      %s150 = sphi 0, %s150
      %s152 = sphi 0, %s150
      %s153 = sphi 0, %s152
      %s167 = sphi 0, %s153
      %s171 = sphi 0, %s171
      %s173 = sphi 0, %s171
      %s174 = sphi 0, %s173
      %s188 = sphi 0, %s174
      %s192 = sphi 0, %s192
      %s194 = sphi 0, %s192
      %s195 = sphi 0, %s194
      %s209 = sphi 0, %s195
      %s215 = sphi 0, %s217
      %s218 = sphi 0, %s215
      %s219 = sphi 0, %s218
      %s235 = sphi 0, %s219
    $region4: #{tpu_custom_call.1} parent=1 // loop_header_branch
      %20 = sbr.rel (%p18) target = $region8
    $region5: #{tpu_custom_call.1} parent=1 // loop_body
      %s22 = ssub.s32 %s17, 1
      %s23 = ssub.s32 %s17, 2
      %s24 = sadd.s32 %s17, 1
      %s25 = ssub.s32 %s17, %s24
      %p26 = scmp.eq.s32.totalorder %s25, 0
      %s28 = sadd.s32 %s27, 1
      %s29 = scalar_select %p26, %s27, %s28
      %p32 = pneg %p26
      %p33 = scmp.eq.s32.totalorder %s17, 1
      %p34 = por %p32, %p33
      %p35 = scmp.ne.s32.totalorder %s27, %s30
      %p36 = scmp.eq.s32.totalorder %s17, 0
      %p37 = por %p35, %p36
      %p38 = scmp.ne.s32.totalorder %s27, %s30
      %p39 = scmp.eq.s32.totalorder %s22, 1
      %p40 = por %p38, %p39
      %p41 = scmp.ne.s32.totalorder %s30, %s31
      %p42 = scmp.eq.s32.totalorder %s22, 0
      %p43 = por %p41, %p42
      %p44 = scmp.ne.s32.totalorder %s30, %s31
      %p45 = scmp.eq.s32.totalorder %s23, 1
      %p46 = por %p44, %p45
      %p48 = scmp.ne.s32.totalorder %s31, %s47
      %p49 = scmp.eq.s32.totalorder %s23, 0
      %p50 = por %p48, %p49
      %s51 = ssub.s32 %s17, %s24
      %p52 = scmp.eq.s32.totalorder %s51, 0
      %s54 = sadd.s32 %s53, 1
      %s55 = scalar_select %p52, %s53, %s54
      %p58 = pneg %p52
      %p59 = scmp.eq.s32.totalorder %s17, 1
      %p60 = por %p58, %p59
      %p61 = scmp.ne.s32.totalorder %s53, %s56
      %p62 = scmp.eq.s32.totalorder %s17, 0
      %p63 = por %p61, %p62
      %p64 = scmp.ne.s32.totalorder %s53, %s56
      %p65 = scmp.eq.s32.totalorder %s22, 1
      %p66 = por %p64, %p65
      %p67 = scmp.ne.s32.totalorder %s56, %s57
      %p68 = scmp.eq.s32.totalorder %s22, 0
      %p69 = por %p67, %p68
      %p70 = scmp.ne.s32.totalorder %s56, %s57
      %p71 = scmp.eq.s32.totalorder %s23, 1
      %p72 = por %p70, %p71
      %p74 = scmp.ne.s32.totalorder %s57, %s73
      %p75 = scmp.eq.s32.totalorder %s23, 0
      %p76 = por %p74, %p75
      %s77 = ssub.s32 %s17, %s24
      %p78 = scmp.eq.s32.totalorder %s77, 0
      %s80 = sadd.s32 %s79, 1
      %s81 = scalar_select %p78, %s79, %s80
      %p84 = pneg %p78
      %p85 = scmp.eq.s32.totalorder %s17, 1
      %p86 = por %p84, %p85
      %p87 = scmp.ne.s32.totalorder %s79, %s82
      %p88 = scmp.eq.s32.totalorder %s17, 0
      %p89 = por %p87, %p88
      %p90 = scmp.ne.s32.totalorder %s79, %s82
      %p91 = scmp.eq.s32.totalorder %s22, 1
      %p92 = por %p90, %p91
      %p93 = scmp.ne.s32.totalorder %s82, %s83
      %p94 = scmp.eq.s32.totalorder %s22, 0
      %p95 = por %p93, %p94
      %p96 = scmp.ne.s32.totalorder %s82, %s83
      %p97 = scmp.eq.s32.totalorder %s23, 1
      %p98 = por %p96, %p97
      %p100 = scmp.ne.s32.totalorder %s83, %s99
      %p101 = scmp.eq.s32.totalorder %s23, 0
      %p102 = por %p100, %p101
      %s103 = ssub.s32 %s17, %s24
      %p104 = scmp.eq.s32.totalorder %s103, 0
      %s106 = sadd.s32 %s105, 1
      %s107 = scalar_select %p104, %s105, %s106
      %p110 = pneg %p104
      %p111 = scmp.eq.s32.totalorder %s17, 1
      %p112 = por %p110, %p111
      %p113 = scmp.ne.s32.totalorder %s105, %s108
      %p114 = scmp.eq.s32.totalorder %s17, 0
      %p115 = por %p113, %p114
      %p116 = scmp.ne.s32.totalorder %s105, %s108
      %p117 = scmp.eq.s32.totalorder %s22, 1
      %p118 = por %p116, %p117
      %p119 = scmp.ne.s32.totalorder %s108, %s109
      %p120 = scmp.eq.s32.totalorder %s22, 0
      %p121 = por %p119, %p120
      %p122 = scmp.ne.s32.totalorder %s108, %s109
      %p123 = scmp.eq.s32.totalorder %s23, 1
      %p124 = por %p122, %p123
      %p126 = scmp.ne.s32.totalorder %s109, %s125
      %p127 = scmp.eq.s32.totalorder %s23, 0
      %p128 = por %p126, %p127
      %s130 = sadd.s32 %s129, 1
      %p133 = scmp.eq.s32.totalorder %s17, 1
      %p134 = scmp.ne.s32.totalorder %s129, %s131
      %p135 = scmp.eq.s32.totalorder %s17, 0
      %p136 = por %p134, %p135
      %p137 = scmp.ne.s32.totalorder %s129, %s131
      %p138 = scmp.eq.s32.totalorder %s22, 1
      %p139 = por %p137, %p138
      %p140 = scmp.ne.s32.totalorder %s131, %s132
      %p141 = scmp.eq.s32.totalorder %s22, 0
      %p142 = por %p140, %p141
      %p143 = scmp.ne.s32.totalorder %s131, %s132
      %p144 = scmp.eq.s32.totalorder %s23, 1
      %p145 = por %p143, %p144
      %p147 = scmp.ne.s32.totalorder %s132, %s146
      %p148 = scmp.eq.s32.totalorder %s23, 0
      %p149 = por %p147, %p148
      %s151 = sadd.s32 %s150, 1
      %p154 = scmp.eq.s32.totalorder %s17, 1
      %p155 = scmp.ne.s32.totalorder %s150, %s152
      %p156 = scmp.eq.s32.totalorder %s17, 0
      %p157 = por %p155, %p156
      %p158 = scmp.ne.s32.totalorder %s150, %s152
      %p159 = scmp.eq.s32.totalorder %s22, 1
      %p160 = por %p158, %p159
      %p161 = scmp.ne.s32.totalorder %s152, %s153
      %p162 = scmp.eq.s32.totalorder %s22, 0
      %p163 = por %p161, %p162
      %p164 = scmp.ne.s32.totalorder %s152, %s153
      %p165 = scmp.eq.s32.totalorder %s23, 1
      %p166 = por %p164, %p165
      %p168 = scmp.ne.s32.totalorder %s153, %s167
      %p169 = scmp.eq.s32.totalorder %s23, 0
      %p170 = por %p168, %p169
      %s172 = sadd.s32 %s171, 1
      %p175 = scmp.eq.s32.totalorder %s17, 1
      %p176 = scmp.ne.s32.totalorder %s171, %s173
      %p177 = scmp.eq.s32.totalorder %s17, 0
      %p178 = por %p176, %p177
      %p179 = scmp.ne.s32.totalorder %s171, %s173
      %p180 = scmp.eq.s32.totalorder %s22, 1
      %p181 = por %p179, %p180
      %p182 = scmp.ne.s32.totalorder %s173, %s174
      %p183 = scmp.eq.s32.totalorder %s22, 0
      %p184 = por %p182, %p183
      %p185 = scmp.ne.s32.totalorder %s173, %s174
      %p186 = scmp.eq.s32.totalorder %s23, 1
      %p187 = por %p185, %p186
      %p189 = scmp.ne.s32.totalorder %s174, %s188
      %p190 = scmp.eq.s32.totalorder %s23, 0
      %p191 = por %p189, %p190
      %s193 = sadd.s32 %s192, 1
      %p196 = scmp.eq.s32.totalorder %s17, 1
      %p197 = scmp.ne.s32.totalorder %s192, %s194
      %p198 = scmp.eq.s32.totalorder %s17, 0
      %p199 = por %p197, %p198
      %p200 = scmp.ne.s32.totalorder %s192, %s194
      %p201 = scmp.eq.s32.totalorder %s22, 1
      %p202 = por %p200, %p201
      %p203 = scmp.ne.s32.totalorder %s194, %s195
      %p204 = scmp.eq.s32.totalorder %s22, 0
      %p205 = por %p203, %p204
      %p206 = scmp.ne.s32.totalorder %s194, %s195
      %p207 = scmp.eq.s32.totalorder %s23, 1
      %p208 = por %p206, %p207
      %p210 = scmp.ne.s32.totalorder %s195, %s209
      %p211 = scmp.eq.s32.totalorder %s23, 0
      %p212 = por %p210, %p211
      %s213 = ssub.s32 %s17, %s24
      %p214 = scmp.eq.s32.totalorder %s213, 0
      %s216 = sadd.s32 %s215, 1
      %s217 = scalar_select %p214, %s215, %s216
      %p220 = pneg %p214
      %p221 = scmp.eq.s32.totalorder %s17, 1
      %p222 = por %p220, %p221
      %p223 = scmp.ne.s32.totalorder %s215, %s218
      %p224 = scmp.eq.s32.totalorder %s17, 0
      %p225 = por %p223, %p224
      %p226 = scmp.ne.s32.totalorder %s215, %s218
      %p227 = scmp.eq.s32.totalorder %s22, 1
      %p228 = por %p226, %p227
      %p229 = scmp.ne.s32.totalorder %s218, %s219
      %p230 = scmp.eq.s32.totalorder %s22, 0
      %p231 = por %p229, %p230
      %p232 = scmp.ne.s32.totalorder %s218, %s219
      %p233 = scmp.eq.s32.totalorder %s23, 1
      %p234 = por %p232, %p233
      %p236 = scmp.ne.s32.totalorder %s219, %s235
      %p237 = scmp.eq.s32.totalorder %s23, 0
      %p238 = por %p236, %p237
      %p239 = scmp.le.s32.totalorder 1, %s17
      %p240 = scmp.lt.s32.totalorder %s17, 3
      %p241 = pnand %p239, %p240
      %p242 = pneg %p241
      // Predicated region
      $region9: #{tpu_custom_call.1} parent=5 // pred_check
        _
      $region10: #{tpu_custom_call.1} parent=5 // pred_check_branch
        %244 = sbr.rel (%p241) target = $region12
      $region11: #{tpu_custom_call.1} parent=5 // pred_region
        %s245 = ssub.s32 %s17, 1
        // Predicated region
        $region13: #{tpu_custom_call.1} parent=11 // pred_check
          %p246 = pneg %p142
        $region14: #{tpu_custom_call.1} parent=11 // pred_check_branch
          %248 = sbr.rel (%p246) target = $region16
        $region15: #{tpu_custom_call.1} parent=11 // pred_region
          _
        $region16: #{tpu_custom_call.1} parent=11 // pred_fallthru
          _
        // Predicated region
        $region17: #{tpu_custom_call.1} parent=11 // pred_check
          %p249 = pneg %p163
        $region18: #{tpu_custom_call.1} parent=11 // pred_check_branch
          %251 = sbr.rel (%p249) target = $region20
        $region19: #{tpu_custom_call.1} parent=11 // pred_region
          _
        $region20: #{tpu_custom_call.1} parent=11 // pred_fallthru
          _
        // Predicated region
        $region21: #{tpu_custom_call.1} parent=11 // pred_check
          %p252 = pneg %p184
        $region22: #{tpu_custom_call.1} parent=11 // pred_check_branch
          %254 = sbr.rel (%p252) target = $region24
        $region23: #{tpu_custom_call.1} parent=11 // pred_region
          _
        $region24: #{tpu_custom_call.1} parent=11 // pred_fallthru
          _
        // Predicated region
        $region25: #{tpu_custom_call.1} parent=11 // pred_check
          %p255 = pneg %p205
        $region26: #{tpu_custom_call.1} parent=11 // pred_check_branch
          %257 = sbr.rel (%p255) target = $region28
        $region27: #{tpu_custom_call.1} parent=11 // pred_region
          _
        $region28: #{tpu_custom_call.1} parent=11 // pred_fallthru
          _
      $region12: #{tpu_custom_call.1} parent=5 // pred_fallthru
        _
      %p258 = scmp.lt.s32.totalorder %s17, 2
      // Predicated region
      $region29: #{tpu_custom_call.1} parent=5 // pred_check
        %p259 = pneg %p258
      $region30: #{tpu_custom_call.1} parent=5 // pred_check_branch
        %261 = sbr.rel (%p259) target = $region32
      $region31: #{tpu_custom_call.1} parent=5 // pred_region
        // Predicated region
        $region33: #{tpu_custom_call.1} parent=31 // pred_check
          %p262 = pneg %p37
        $region34: #{tpu_custom_call.1} parent=31 // pred_check_branch
          %264 = sbr.rel (%p262) target = $region36
        $region35: #{tpu_custom_call.1} parent=31 // pred_region
          %p265 = scmp.lt.s32.totalorder %s17, 1
          %s266 = scalar_select %p265, %s17, 1
          %s267 = smul.addr %s266, 8
          %s268 = scalar_lea.vmem %s0, %s267
        $region36: #{tpu_custom_call.1} parent=31 // pred_fallthru
          _
        // Predicated region
        $region37: #{tpu_custom_call.1} parent=31 // pred_check
          %p269 = pneg %p63
        $region38: #{tpu_custom_call.1} parent=31 // pred_check_branch
          %271 = sbr.rel (%p269) target = $region40
        $region39: #{tpu_custom_call.1} parent=31 // pred_region
          %p272 = scmp.lt.s32.totalorder %s17, 1
          %s273 = scalar_select %p272, %s17, 1
          %s274 = smul.addr %s273, 8
          %s275 = scalar_lea.vmem %s1, %s274
        $region40: #{tpu_custom_call.1} parent=31 // pred_fallthru
          _
        // Predicated region
        $region41: #{tpu_custom_call.1} parent=31 // pred_check
          %p276 = pneg %p89
        $region42: #{tpu_custom_call.1} parent=31 // pred_check_branch
          %278 = sbr.rel (%p276) target = $region44
        $region43: #{tpu_custom_call.1} parent=31 // pred_region
          %p279 = scmp.lt.s32.totalorder %s17, 1
          %s280 = scalar_select %p279, %s17, 1
          %s281 = smul.addr %s280, 8
          %s282 = scalar_lea.vmem %s2, %s281
        $region44: #{tpu_custom_call.1} parent=31 // pred_fallthru
          _
        // Predicated region
        $region45: #{tpu_custom_call.1} parent=31 // pred_check
          %p283 = pneg %p115
        $region46: #{tpu_custom_call.1} parent=31 // pred_check_branch
          %285 = sbr.rel (%p283) target = $region48
        $region47: #{tpu_custom_call.1} parent=31 // pred_region
          %p286 = scmp.lt.s32.totalorder %s17, 1
          %s287 = scalar_select %p286, %s17, 1
          %s288 = smul.addr %s287, 8
          %s289 = scalar_lea.vmem %s3, %s288
        $region48: #{tpu_custom_call.1} parent=31 // pred_fallthru
          _
      $region32: #{tpu_custom_call.1} parent=5 // pred_fallthru
        _
      %p290 = scmp.le.s32.totalorder 1, %s17
      %p291 = scmp.lt.s32.totalorder %s17, 3
      %p292 = pnand %p290, %p291
      %p293 = pneg %p292
      // Predicated region
      $region49: #{tpu_custom_call.1} parent=5 // pred_check
        _
      $region50: #{tpu_custom_call.1} parent=5 // pred_check_branch
        %295 = sbr.rel (%p292) target = $region52
      $region51: #{tpu_custom_call.1} parent=5 // pred_region
        %s296 = ssub.s32 %s17, 1
        %p297 = scmp.lt.s32.totalorder %s22, 1
        %s298 = scalar_select %p297, %s22, 1
        %s299 = smul.addr %s298, 8
        %s300 = scalar_lea.vmem %s0, %s299
        %p301 = pneg %p43
        %p302 = pneg %p40
        %p303 = scmp.lt.s32.totalorder %s22, 1
        %s304 = scalar_select %p303, %s22, 1
        %s305 = smul.addr %s304, 8
        %s306 = scalar_lea.vmem %s1, %s305
        %p307 = pneg %p69
        %p308 = pneg %p66
        %p309 = scmp.lt.s32.totalorder %s22, 1
        %s310 = scalar_select %p309, %s22, 1
        %s311 = smul.addr %s310, 8
        %s312 = scalar_lea.vmem %s2, %s311
        %p313 = pneg %p95
        %p314 = pneg %p92
        %p315 = scmp.lt.s32.totalorder %s22, 1
        %s316 = scalar_select %p315, %s22, 1
        %s317 = smul.addr %s316, 8
        %s318 = scalar_lea.vmem %s3, %s317
        %p319 = pneg %p121
        %p320 = pneg %p118
        %p321 = pneg %p142
        %p322 = pneg %p139
        %p323 = pneg %p163
        %p324 = pneg %p160
        %p325 = pneg %p184
        %p326 = pneg %p181
        %p327 = pneg %p205
        %p328 = pneg %p202
        %p329 = pneg %p231
        %p330 = pneg %p228
        %s331 = sand.u32 %s218, 1
        %s332 = scalar_lea.sflag [#allocation3], %s331
        %s333 = sand.u32 %s218, 1
        %s334 = smul.addr %s333, 8
        %s335 = scalar_lea.vmem [#allocation2], %s334
        %p336 = scmp.lt.s32.totalorder %s22, 1
        %s337 = scalar_select %p336, %s22, 1
        %s338 = smul.addr %s337, 8
        %s339 = scalar_lea.vmem %s0, %s338
        %p340 = scmp.lt.s32.totalorder %s22, 1
        %s341 = scalar_select %p340, %s22, 1
        %s342 = smul.addr %s341, 8
        %s343 = scalar_lea.vmem %s1, %s342
        %p344 = scmp.lt.s32.totalorder %s22, 1
        %s345 = scalar_select %p344, %s22, 1
        %s346 = smul.addr %s345, 8
        %s347 = scalar_lea.vmem %s2, %s346
        %p348 = scmp.lt.s32.totalorder %s22, 1
        %s349 = scalar_select %p348, %s22, 1
        %s350 = smul.addr %s349, 8
        %s351 = scalar_lea.vmem %s3, %s350
        %v353 = vld [vmem:[%s343] sm:$0xff]
        %v354 = vld [vmem:[%s347] sm:$0xff]
        %v355 = vld [vmem:[%s351] sm:$0xff]
        %v356 = vld [vmem:[%s5] sm:$0x1]
        %358 = vrot.lane.b32.xlu0 %v353, 32
        %v359 = vpop.permute.xlu0 %358
        %361 = vrot.lane.b32.xlu0 %v353, 64
        %v362 = vpop.permute.xlu0 %361
        %364 = vrot.lane.b32.xlu0 %v353, 96
        %v365 = vpop.permute.xlu0 %364
        %vm367 = vcmask 261120
        %v368 = vsel %vm367, %v353, %v359
        %vm369 = vcmask 523264
        %v370 = vsel %vm369, %v368, %v362
        %vm371 = vcmask 785408
        %v372 = vsel %vm371, %v370, %v365
        %v373 = vmul.f32 %v372, %v354
        %v374 = vpack.c.bf16 %v373, %v373
        %v375 = vld [vmem:[%s4] sm:$0xf]
        %v376 = vld [vmem:[%s4 + $0x4] sm:$0xf]
        %v377 = vld [vmem:[%s4 + $0x8] sm:$0xf]
        %v378 = vld [vmem:[%s4 + $0xc] sm:$0xf]
        %v379 = vld [vmem:[%s4 + $0x10] sm:$0xf]
        %v380 = vld [vmem:[%s4 + $0x14] sm:$0xf]
        %v381 = vld [vmem:[%s4 + $0x18] sm:$0xf]
        %v382 = vld [vmem:[%s4 + $0x1c] sm:$0xf]
        %v383 = vld [vmem:[%s4 + $0x20] sm:$0xf]
        %v384 = vld [vmem:[%s4 + $0x24] sm:$0xf]
        %v385 = vld [vmem:[%s4 + $0x28] sm:$0xf]
        %v386 = vld [vmem:[%s4 + $0x2c] sm:$0xf]
        %v387 = vld [vmem:[%s4 + $0x30] sm:$0xf]
        %v388 = vld [vmem:[%s4 + $0x34] sm:$0xf]
        %v389 = vld [vmem:[%s4 + $0x38] sm:$0xf]
        %v390 = vld [vmem:[%s4 + $0x3c] sm:$0xf]
        %392 = vset.pattern.permute.xlu0 0
        %393 = vperm.xlu0 %392, %v355
        %v394 = vpop.permute.xlu0 %393
        %v397 = vlaneseq
        %v398 = vshrl.u32 %v397, 7
        %v399 = vsub.s32 0, %v398
        %v400 = vrot.slane %v356, %v399
        %v402 = vmul.f32 %v394, %v400
        %403 = vset.pattern.permute.xlu0 1
        %404 = vperm.xlu0 %403, %v355
        %v405 = vpop.permute.xlu0 %404
        %v407 = vmul.f32 %v405, %v400
        %408 = vset.pattern.permute.xlu0 2
        %409 = vperm.xlu0 %408, %v355
        %v410 = vpop.permute.xlu0 %409
        %v412 = vmul.f32 %v410, %v400
        %413 = vset.pattern.permute.xlu0 3
        %414 = vperm.xlu0 %413, %v355
        %v415 = vpop.permute.xlu0 %414
        %v417 = vmul.f32 %v415, %v400
        %419 = vrot.lane.b32.xlu0 %v407, 32
        %v420 = vpop.permute.xlu0 %419
        %423 = vrot.lane.b32.xlu0 %v412, 64
        %v424 = vpop.permute.xlu0 %423
        %427 = vrot.lane.b32.xlu0 %v417, 96
        %v428 = vpop.permute.xlu0 %427
        %v430 = vsel %vm367, %v402, %v420
        %v431 = vsel %vm369, %v430, %v424
        %v432 = vsel %vm371, %v431, %v428
        %v449 = vunpack.c.l.b16 %v375
        %v450 = vunpack.c.l.b16 %v376
        %v451 = vunpack.c.l.b16 %v377
        %v452 = vunpack.c.l.b16 %v378
        %v453 = vunpack.c.l.b16 %v379
        %v454 = vunpack.c.l.b16 %v380
        %v455 = vunpack.c.l.b16 %v381
        %v456 = vunpack.c.l.b16 %v382
        %v457 = vunpack.c.l.b16 %v383
        %v458 = vunpack.c.l.b16 %v384
        %v459 = vunpack.c.l.b16 %v385
        %v460 = vunpack.c.l.b16 %v386
        %v461 = vunpack.c.l.b16 %v387
        %v462 = vunpack.c.l.b16 %v388
        %v463 = vunpack.c.l.b16 %v389
        %v464 = vunpack.c.l.b16 %v390
        %v465 = vpack.c.b16 %v450, %v449
        %v466 = vpack.c.b16 %v452, %v451
        %v467 = vpack.c.b16 %v454, %v453
        %v468 = vpack.c.b16 %v456, %v455
        %v469 = vpack.c.b16 %v458, %v457
        %v470 = vpack.c.b16 %v460, %v459
        %v471 = vpack.c.b16 %v462, %v461
        %v472 = vpack.c.b16 %v464, %v463
        %481 = vmatprep.subr.bf16.mxu0 0
        %482 = vmatpush1.bf16.msra.mxu0 %v465
        %483 = vmatprep.subr.bf16.mxu0 0
        %484 = vmatpush1.bf16.msra.mxu0 %v466
        %485 = vmatprep.subr.bf16.mxu0 0
        %486 = vmatpush1.bf16.msra.mxu0 %v467
        %487 = vmatprep.subr.bf16.mxu0 0
        %488 = vmatpush1.bf16.msra.mxu0 %v468
        %489 = vmatprep.subr.bf16.mxu0 0
        %490 = vmatpush1.bf16.msra.mxu0 %v469
        %491 = vmatprep.subr.bf16.mxu0 0
        %492 = vmatpush1.bf16.msra.mxu0 %v470
        %493 = vmatprep.subr.bf16.mxu0 0
        %494 = vmatpush1.bf16.msra.mxu0 %v471
        %495 = vmatprep.subr.bf16.mxu0 0
        %496 = vmatpush1.bf16.msra.mxu0 %v472
        %497 = vmatprep.subr.bf16.mxu0 0
        %498 = vmatpush1.bf16.msra.mxu0 0
        %499 = vmatprep.subr.bf16.mxu0 0
        %500 = vmatpush1.bf16.msra.mxu0 0
        %501 = vmatprep.subr.bf16.mxu0 0
        %502 = vmatpush1.bf16.msra.mxu0 0
        %503 = vmatprep.subr.bf16.mxu0 0
        %504 = vmatpush1.bf16.msra.mxu0 0
        %505 = vmatprep.subr.bf16.mxu0 0
        %506 = vmatpush1.bf16.msra.mxu0 0
        %507 = vmatprep.subr.bf16.mxu0 0
        %508 = vmatpush1.bf16.msra.mxu0 0
        %509 = vmatprep.subr.bf16.mxu0 0
        %510 = vmatpush1.bf16.msra.mxu0 0
        %511 = vmatprep.subr.bf16.mxu0 0
        %512 = vmatpush1.bf16.msra.mxu0 0
        %513 = vmatprep.mubr.bf16.mxu0 0
        %514 = vmatmul.mubr.bf16.gmra.mrb[0].mxu0 %v374
        %v515 = vpop.f32.mrb[0].mxu0
        %v516 = vadd.f32 %v432, %v515
        %v517 = vpop.f32.mrb[0].mxu0
        %v518 = vpop.f32.mrb[0].mxu0
        %v519 = vpop.f32.mrb[0].mxu0
        %520 = vdwg.mxu0
        %vm521 = vcmp.ge.f32.partialorder %v516, 0.0
        %v522 = vmul.f32 %v516, 0.2
        %v523 = vsel %vm521, %v516, %v522
        %v524 = vpack.c.bf16 %v523, %v523
        %v525 = vld [vmem:[%s6] sm:$0xf]
        %v526 = vld [vmem:[%s6 + $0x4] sm:$0xf]
        %v527 = vld [vmem:[%s6 + $0x8] sm:$0xf]
        %v528 = vld [vmem:[%s6 + $0xc] sm:$0xf]
        %v529 = vld [vmem:[%s6 + $0x10] sm:$0xf]
        %v530 = vld [vmem:[%s6 + $0x14] sm:$0xf]
        %v531 = vld [vmem:[%s6 + $0x18] sm:$0xf]
        %v532 = vld [vmem:[%s6 + $0x1c] sm:$0xf]
        %v533 = vld [vmem:[%s6 + $0x20] sm:$0xf]
        %v534 = vld [vmem:[%s6 + $0x24] sm:$0xf]
        %v535 = vld [vmem:[%s6 + $0x28] sm:$0xf]
        %v536 = vld [vmem:[%s6 + $0x2c] sm:$0xf]
        %v537 = vld [vmem:[%s6 + $0x30] sm:$0xf]
        %v538 = vld [vmem:[%s6 + $0x34] sm:$0xf]
        %v539 = vld [vmem:[%s6 + $0x38] sm:$0xf]
        %v540 = vld [vmem:[%s6 + $0x3c] sm:$0xf]
        %v557 = vunpack.c.l.b16 %v525
        %v558 = vunpack.c.l.b16 %v526
        %v559 = vunpack.c.l.b16 %v527
        %v560 = vunpack.c.l.b16 %v528
        %v561 = vunpack.c.l.b16 %v529
        %v562 = vunpack.c.l.b16 %v530
        %v563 = vunpack.c.l.b16 %v531
        %v564 = vunpack.c.l.b16 %v532
        %v565 = vunpack.c.l.b16 %v533
        %v566 = vunpack.c.l.b16 %v534
        %v567 = vunpack.c.l.b16 %v535
        %v568 = vunpack.c.l.b16 %v536
        %v569 = vunpack.c.l.b16 %v537
        %v570 = vunpack.c.l.b16 %v538
        %v571 = vunpack.c.l.b16 %v539
        %v572 = vunpack.c.l.b16 %v540
        %v573 = vpack.c.b16 %v558, %v557
        %v574 = vpack.c.b16 %v560, %v559
        %v575 = vpack.c.b16 %v562, %v561
        %v576 = vpack.c.b16 %v564, %v563
        %v577 = vpack.c.b16 %v566, %v565
        %v578 = vpack.c.b16 %v568, %v567
        %v579 = vpack.c.b16 %v570, %v569
        %v580 = vpack.c.b16 %v572, %v571
        %589 = vmatprep.subr.bf16.mxu0 0
        %590 = vmatpush1.bf16.msra.mxu0 %v573
        %591 = vmatprep.subr.bf16.mxu0 0
        %592 = vmatpush1.bf16.msra.mxu0 %v574
        %593 = vmatprep.subr.bf16.mxu0 0
        %594 = vmatpush1.bf16.msra.mxu0 %v575
        %595 = vmatprep.subr.bf16.mxu0 0
        %596 = vmatpush1.bf16.msra.mxu0 %v576
        %597 = vmatprep.subr.bf16.mxu0 0
        %598 = vmatpush1.bf16.msra.mxu0 %v577
        %599 = vmatprep.subr.bf16.mxu0 0
        %600 = vmatpush1.bf16.msra.mxu0 %v578
        %601 = vmatprep.subr.bf16.mxu0 0
        %602 = vmatpush1.bf16.msra.mxu0 %v579
        %603 = vmatprep.subr.bf16.mxu0 0
        %604 = vmatpush1.bf16.msra.mxu0 %v580
        %605 = vmatprep.subr.bf16.mxu0 0
        %606 = vmatpush1.bf16.msra.mxu0 0
        %607 = vmatprep.subr.bf16.mxu0 0
        %608 = vmatpush1.bf16.msra.mxu0 0
        %609 = vmatprep.subr.bf16.mxu0 0
        %610 = vmatpush1.bf16.msra.mxu0 0
        %611 = vmatprep.subr.bf16.mxu0 0
        %612 = vmatpush1.bf16.msra.mxu0 0
        %613 = vmatprep.subr.bf16.mxu0 0
        %614 = vmatpush1.bf16.msra.mxu0 0
        %615 = vmatprep.subr.bf16.mxu0 0
        %616 = vmatpush1.bf16.msra.mxu0 0
        %617 = vmatprep.subr.bf16.mxu0 0
        %618 = vmatpush1.bf16.msra.mxu0 0
        %619 = vmatprep.subr.bf16.mxu0 0
        %620 = vmatpush1.bf16.msra.mxu0 0
        %621 = vmatprep.mubr.bf16.mxu0 0
        %622 = vmatmul.mubr.bf16.gmra.mrb[0].mxu0 %v524
        %v623 = vpop.f32.mrb[0].mxu0
        %v624 = vadd.f32 0.0, %v623
        %v625 = vpop.f32.mrb[0].mxu0
        %v626 = vpop.f32.mrb[0].mxu0
        %v627 = vpop.f32.mrb[0].mxu0
        %628 = vdwg.mxu0
        %vm629 = vcmask 31744
        %v630 = vsel %vm629, %v624, -inf
        %631 = vmax.xlane.f32.xlu0 %v630
        %v632 = vpop.xlane.xlu0 %631
        %v633 = vsub.f32 %v624, %v632
        %v634 = vmul.f32 %v633, 1.442695
        %v635 = vpow.pop %v634
        %v636 = vsel %vm629, %v635, 0.0
        %637 = vadd.xlane.f32.xlu0 %v636
        %v638 = vpop.xlane.xlu0 %637
        %v639 = vrcp.pop %v638
        %641 = vset.pattern.permute.xlu0 0
        %642 = vperm.xlu0 %641, %v635
        %v643 = vpop.permute.xlu0 %642
        %v645 = vmul.f32 %v643, %v354
        %646 = vset.pattern.permute.xlu0 1
        %647 = vperm.xlu0 %646, %v635
        %v648 = vpop.permute.xlu0 %647
        %v650 = vmul.f32 %v648, %v354
        %652 = vrot.lane.b32.xlu0 %v650, 96
        %v653 = vpop.permute.xlu0 %652
        %v655 = vadd.f32 %v645, %v653
        %656 = vset.pattern.permute.xlu0 2
        %657 = vperm.xlu0 %656, %v635
        %v658 = vpop.permute.xlu0 %657
        %v660 = vmul.f32 %v658, %v354
        %662 = vrot.lane.b32.xlu0 %v660, 64
        %v663 = vpop.permute.xlu0 %662
        %v665 = vadd.f32 %v655, %v663
        %666 = vset.pattern.permute.xlu0 3
        %667 = vperm.xlu0 %666, %v635
        %v668 = vpop.permute.xlu0 %667
        %v670 = vmul.f32 %v668, %v354
        %672 = vrot.lane.b32.xlu0 %v670, 32
        %v673 = vpop.permute.xlu0 %672
        %v675 = vadd.f32 %v665, %v673
        %v676 = vmul.f32 %v675, %v639
        %v677 = vld [vmem:[%s339] sm:$0xff]
        %679 = vrot.lane.b32.xlu0 %v676, 32
        %v680 = vpop.permute.xlu0 %679
        %v682 = vsel %vm367, %v677, %v680
        %v683 = vpack.c.bf16 %v682, %v682
        %v684 = vld [vmem:[%s7] sm:$0xf]
        %v685 = vld [vmem:[%s7 + $0x4] sm:$0xf]
        %v686 = vld [vmem:[%s7 + $0x8] sm:$0xf]
        %v687 = vld [vmem:[%s7 + $0xc] sm:$0xf]
        %v688 = vld [vmem:[%s7 + $0x10] sm:$0xf]
        %v689 = vld [vmem:[%s7 + $0x14] sm:$0xf]
        %v690 = vld [vmem:[%s7 + $0x18] sm:$0xf]
        %v691 = vld [vmem:[%s7 + $0x1c] sm:$0xf]
        %v700 = vunpack.c.l.b16 %v684
        %v701 = vunpack.c.l.b16 %v685
        %v702 = vunpack.c.l.b16 %v686
        %v703 = vunpack.c.l.b16 %v687
        %v704 = vunpack.c.l.b16 %v688
        %v705 = vunpack.c.l.b16 %v689
        %v706 = vunpack.c.l.b16 %v690
        %v707 = vunpack.c.l.b16 %v691
        %v708 = vpack.c.b16 %v701, %v700
        %v709 = vpack.c.b16 %v703, %v702
        %v710 = vpack.c.b16 %v705, %v704
        %v711 = vpack.c.b16 %v707, %v706
        %v717 = vsel %vm369, %v683, 0
        %719 = vmatprep.subr.bf16.mxu0 0
        %720 = vmatpush1.bf16.msra.mxu0 %v708
        %721 = vmatprep.subr.bf16.mxu0 0
        %722 = vmatpush1.bf16.msra.mxu0 %v709
        %723 = vmatprep.subr.bf16.mxu0 0
        %724 = vmatpush1.bf16.msra.mxu0 %v710
        %725 = vmatprep.subr.bf16.mxu0 0
        %726 = vmatpush1.bf16.msra.mxu0 %v711
        %727 = vmatprep.subr.bf16.mxu0 0
        %728 = vmatpush1.bf16.msra.mxu0 0
        %729 = vmatprep.subr.bf16.mxu0 0
        %730 = vmatpush1.bf16.msra.mxu0 0
        %731 = vmatprep.subr.bf16.mxu0 0
        %732 = vmatpush1.bf16.msra.mxu0 0
        %733 = vmatprep.subr.bf16.mxu0 0
        %734 = vmatpush1.bf16.msra.mxu0 0
        %735 = vmatprep.subr.bf16.mxu0 0
        %736 = vmatpush1.bf16.msra.mxu0 0
        %737 = vmatprep.subr.bf16.mxu0 0
        %738 = vmatpush1.bf16.msra.mxu0 0
        %739 = vmatprep.subr.bf16.mxu0 0
        %740 = vmatpush1.bf16.msra.mxu0 0
        %741 = vmatprep.subr.bf16.mxu0 0
        %742 = vmatpush1.bf16.msra.mxu0 0
        %743 = vmatprep.subr.bf16.mxu0 0
        %744 = vmatpush1.bf16.msra.mxu0 0
        %745 = vmatprep.subr.bf16.mxu0 0
        %746 = vmatpush1.bf16.msra.mxu0 0
        %747 = vmatprep.subr.bf16.mxu0 0
        %748 = vmatpush1.bf16.msra.mxu0 0
        %749 = vmatprep.subr.bf16.mxu0 0
        %750 = vmatpush1.bf16.msra.mxu0 0
        %751 = vmatprep.mubr.bf16.mxu0 0
        %752 = vmatmul.mubr.bf16.gmra.mrb[0].mxu0 %v717
        %v753 = vpop.f32.mrb[0].mxu0
        %v754 = vadd.f32 0.0, %v753
        %v755 = vpop.f32.mrb[0].mxu0
        %v756 = vpop.f32.mrb[0].mxu0
        %v757 = vpop.f32.mrb[0].mxu0
        %758 = vdwg.mxu0
        %v759 = vmax.f32 %v754, 0.0
        %760 = vst.msk [vmem:[%s335] sm:$0xff] %vm367, %v759
        %s761 = sand.u32 %s218, 1
        %s762 = scalar_lea.sflag [#allocation3], %s761
        %s763 = sand.u32 %s218, 1
        %s764 = smul.addr %s763, 8
        %s765 = scalar_lea.vmem [#allocation2], %s764
        // Predicated region
        $region53: #{tpu_custom_call.1} parent=51 // pred_check
          %p766 = pneg %p228
        $region54: #{tpu_custom_call.1} parent=51 // pred_check_branch
          %768 = sbr.rel (%p766) target = $region56
        $region55: #{tpu_custom_call.1} parent=51 // pred_region
          %s770 = ssub.s32 128, 128
          %771 = vsyncadd %s762, %s770
          %s772 = smul.addr %s22, 128
          %s773 = scalar_lea.hbm %s8, %s772
          %s775 = sshll.u32 %s765, 4
          %s776 = int_to_ptr.vmem [resolvable:$true] %s775
          %778 = dma.vmem_to_hbm [thread:$0]  %s776, 128, %s773, %s762
        $region56: #{tpu_custom_call.1} parent=51 // pred_fallthru
          _
      $region52: #{tpu_custom_call.1} parent=5 // pred_fallthru
        _
      %p779 = scmp.le.s32.totalorder 2, %s17
      // Predicated region
      $region57: #{tpu_custom_call.1} parent=5 // pred_check
        %p780 = pneg %p779
      $region58: #{tpu_custom_call.1} parent=5 // pred_check_branch
        %782 = sbr.rel (%p780) target = $region60
      $region59: #{tpu_custom_call.1} parent=5 // pred_region
        %s783 = ssub.s32 %s17, 2
        // Predicated region
        $region61: #{tpu_custom_call.1} parent=59 // pred_check
          %p784 = pneg %p234
        $region62: #{tpu_custom_call.1} parent=59 // pred_check_branch
          %786 = sbr.rel (%p784) target = $region64
        $region63: #{tpu_custom_call.1} parent=59 // pred_region
          %s787 = sand.u32 %s219, 1
          %s788 = scalar_lea.sflag [#allocation3], %s787
          %s789 = sand.u32 %s219, 1
          %s790 = smul.addr %s789, 8
          %s791 = scalar_lea.vmem [#allocation2], %s790
          %792 = dma.done %s788, 128
        $region64: #{tpu_custom_call.1} parent=59 // pred_fallthru
          _
      $region60: #{tpu_custom_call.1} parent=5 // pred_fallthru
        _
    $region6: #{tpu_custom_call.1} parent=1 // loop_footer
      %s21 = sadd.s32 1, %s17
    $region7: #{tpu_custom_call.1} parent=1 // loop_footer_branch
      %16 = sbr.rel target = $region3
    $region8: #{tpu_custom_call.1} parent=1 // loop_exit
      _
    %793 = vsyncpa [#allocation3], 1
    %s794 = scalar_lea.sflag [#allocation3], 1
    %795 = vsyncpa %s794, 1

</llo_original>
